<compile_context>
chip_gen: v7x
topology: tpu7x:2x2x1
jax: 0.10.0
libtpu: 0.0.40
codegen_flags: <defaults>
</compile_context>

<pallas_src>
import math

import jax
import jax.numpy as jnp
from jax.experimental import pallas as pl
from jax.experimental.pallas import tpu as pltpu


def _gcn_fused_bias_kernel(adj_ref, x_ref, w_ref, b_ref, o_ref):
    """One output row-block: ((adj_blk @ x) @ W) + bias, all f32 accumulation."""
    # adj_ref: (tm, N)   x_ref: (N, Fin)   w_ref: (Fin, Fout)   b_ref: (1, Fout)
    t = jnp.dot(adj_ref[...], x_ref[...], preferred_element_type=jnp.float32)
    out = jnp.dot(t, w_ref[...], preferred_element_type=jnp.float32) + b_ref[...]
    o_ref[...] = out.astype(o_ref.dtype)


def _gcn_fused_nobias_kernel(adj_ref, x_ref, w_ref, o_ref):
    """One output row-block: (adj_blk @ x) @ W, no bias path (no dummy zeros)."""
    t = jnp.dot(adj_ref[...], x_ref[...], preferred_element_type=jnp.float32)
    o_ref[...] = jnp.dot(t, w_ref[...], preferred_element_type=jnp.float32).astype(
        o_ref.dtype
    )


def graph_convolution(x, adj, weight, bias=None, *, block_rows=128):
    """GraphConvolution.forward: adj @ (x @ weight) [+ bias], fused Pallas kernel.

    x: (N, Fin), adj: (N, N) dense (stands in for the sparse adj of torch.spmm),
    weight: (Fin, Fout), bias: (Fout,) or None.
    """
    n, f_in = x.shape
    assert weight.shape[0] == f_in
    f_out = weight.shape[1]
    assert adj.shape == (n, n)

    # Row tile: 128 keeps >=2 parallel blocks at N=256 (both v7x TCs busy) while
    # the adj@x contraction stays full-width (N) for the MXU.
    tm = min(block_rows, n)
    n_blocks = pl.cdiv(n, tm)
    n_pad = n_blocks * tm

    adj_p = adj
    if n_pad != n:
        # Pad only the adjacency *rows*; contraction dim (columns) stays exact,
        # padded output rows are sliced off below.
        adj_p = jnp.pad(adj, ((0, n_pad - n), (0, 0)))

    in_specs = [
        pl.BlockSpec((tm, n), lambda i: (i, 0)),         # adj row block (streamed)
        pl.BlockSpec((n, f_in), lambda i: (0, 0)),       # full x (VMEM-resident)
        pl.BlockSpec((f_in, f_out), lambda i: (0, 0)),   # full weight (VMEM-resident)
    ]
    args = [adj_p, x, weight]

    if bias is not None:
        bias2d = bias.reshape(1, f_out).astype(jnp.float32)
        in_specs.append(pl.BlockSpec((1, f_out), lambda i: (0, 0)))
        args.append(bias2d)
        kernel = _gcn_fused_bias_kernel
    else:
        kernel = _gcn_fused_nobias_kernel

    out = pl.pallas_call(
        kernel,
        out_shape=jax.ShapeDtypeStruct((n_pad, f_out), x.dtype),
        grid_spec=pltpu.PrefetchScalarGridSpec(
            num_scalar_prefetch=0,
            grid=(n_blocks,),
            in_specs=in_specs,
            out_specs=pl.BlockSpec((tm, f_out), lambda i: (i, 0)),
        ),
        compiler_params=pltpu.CompilerParams(
            dimension_semantics=("parallel",),
        ),
    )(*args)

    return out[:n] if n_pad != n else out


def init_params(key, in_features, out_features, bias=True):
    """Match this module's reset_parameters: data.normal_(-stdv, stdv),
    i.e. normal with mean=-stdv and std=stdv where stdv = 1/sqrt(out_features)."""
    stdv = 1.0 / math.sqrt(out_features)
    kw, kb = jax.random.split(key)
    weight = (
        jax.random.normal(kw, (in_features, out_features), jnp.float32) * stdv - stdv
    )
    b = None
    if bias:
        b = jax.random.normal(kb, (out_features,), jnp.float32) * stdv - stdv
    return weight, b


if __name__ == "__main__":
    num_nodes = 256
    in_features = 128
    out_features = 128

    key = jax.random.PRNGKey(0)
    k_x, k_adj, k_par = jax.random.split(key, 3)

    # Node feature matrix.
    x = jax.random.normal(k_x, (num_nodes, in_features), jnp.float32)

    # Dense (row-normalized) adjacency matrix standing in for the sparse adj.
    raw = jax.random.uniform(k_adj, (num_nodes, num_nodes), jnp.float32)
    adj = jnp.where(raw > 0.9, raw, 0.0)                  # ~10% density
    adj = adj + jnp.eye(num_nodes, dtype=jnp.float32)     # self loops
    adj = adj / jnp.sum(adj, axis=1, keepdims=True)       # row normalize

    weight, bias = init_params(k_par, in_features, out_features, bias=True)

    # Fused Pallas forward (with bias).
    out = graph_convolution(x, adj, weight, bias)
    out = jax.block_until_ready(out)

    # Pure-JAX reference in the original association order.
    ref = adj @ (x @ weight) + bias
    assert out.shape == (num_nodes, out_features)
    assert jnp.allclose(out, ref, atol=1e-4, rtol=1e-4)

    # Also exercise the bias-free kernel path (module supports bias=None).
    out_nb = graph_convolution(x, adj, weight, None)
    out_nb = jax.block_until_ready(out_nb)
    ref_nb = adj @ (x @ weight)
    assert jnp.allclose(out_nb, ref_nb, atol=1e-4, rtol=1e-4)

    print("KERNEL_OK")
</pallas_src>

<mosaic_0001>
module attributes {stable_mosaic.version = 11 : i64} {
  func.func @_gcn_fused_bias_kernel(%arg0: i32, %arg1: memref<128x256xf32, #tpu.memory_space<vmem>>, %arg2: memref<256x128xf32, #tpu.memory_space<vmem>>, %arg3: memref<128x128xf32, #tpu.memory_space<vmem>>, %arg4: memref<1x128xf32, #tpu.memory_space<vmem>>, %arg5: memref<128x128xf32, #tpu.memory_space<vmem>>) attributes {dimension_semantics = [#tpu.dimension_semantics<parallel>], iteration_bounds = array<i64: 2>, scalar_prefetch = 0 : i64, scratch_operands = 0 : i64, tpu.core_type = #tpu.core_type<tc>, window_params = [{transform_indices = @transform_0, window_bounds = array<i64: 128, 256>}, {pipeline_mode = #tpu.pipeline_mode<synchronous>, transform_indices = @transform_1, window_bounds = array<i64: 256, 128>}, {pipeline_mode = #tpu.pipeline_mode<synchronous>, transform_indices = @transform_2, window_bounds = array<i64: 128, 128>}, {pipeline_mode = #tpu.pipeline_mode<synchronous>, transform_indices = @transform_3, window_bounds = array<i64: 1, 128>}, {transform_indices = @transform_4, window_bounds = array<i64: 128, 128>}]} {
    %c0 = arith.constant 0 : index
    %c0_0 = arith.constant 0 : index
    %0 = vector.load %arg1[%c0, %c0_0] : memref<128x256xf32, #tpu.memory_space<vmem>>, vector<128x256xf32>
    %c0_1 = arith.constant 0 : index
    %c0_2 = arith.constant 0 : index
    %1 = vector.load %arg2[%c0_1, %c0_2] : memref<256x128xf32, #tpu.memory_space<vmem>>, vector<256x128xf32>
    %cst = arith.constant dense<0.000000e+00> : vector<128x128xf32>
    %2 = tpu.matmul %0, %1, %cst {dimension_numbers = #tpu.dot_dimension_numbers<[1], [0], [0], [1], [0, 0, 1, 1], [], []>} : vector<128x256xf32>, vector<256x128xf32>, vector<128x128xf32> -> vector<128x128xf32>
    %c0_3 = arith.constant 0 : index
    %c0_4 = arith.constant 0 : index
    %3 = vector.load %arg3[%c0_3, %c0_4] : memref<128x128xf32, #tpu.memory_space<vmem>>, vector<128x128xf32>
    %cst_5 = arith.constant dense<0.000000e+00> : vector<128x128xf32>
    %4 = tpu.matmul %2, %3, %cst_5 {dimension_numbers = #tpu.dot_dimension_numbers<[1], [0], [0], [1], [0, 0, 1, 1], [], []>} : vector<128x128xf32>, vector<128x128xf32>, vector<128x128xf32> -> vector<128x128xf32>
    %c0_6 = arith.constant 0 : index
    %c0_7 = arith.constant 0 : index
    %5 = vector.load %arg4[%c0_6, %c0_7] : memref<1x128xf32, #tpu.memory_space<vmem>>, vector<1x128xf32>
    %6 = vector.broadcast %5 : vector<1x128xf32> to vector<128x128xf32>
    %7 = arith.addf %4, %6 : vector<128x128xf32>
    %c0_8 = arith.constant 0 : index
    %c0_9 = arith.constant 0 : index
    %8 = vector.load %arg5[%c0_8, %c0_9] : memref<128x128xf32, #tpu.memory_space<vmem>>, vector<128x128xf32>
    tpu.vector_store %arg5[%c0_8, %c0_9], %7 {strides = array<i32>} : memref<128x128xf32, #tpu.memory_space<vmem>>, vector<128x128xf32>,
    return
  }
  func.func @transform_0(%arg0: i32) -> (i32, i32) {
    %c0_i32 = arith.constant 0 : i32
    %c0_i32_0 = arith.constant 0 : i32
    return %arg0, %c0_i32 : i32, i32
  }
  func.func @transform_1(%arg0: i32) -> (i32, i32) {
    %c0_i32 = arith.constant 0 : i32
    %c0_i32_0 = arith.constant 0 : i32
    %c0_i32_1 = arith.constant 0 : i32
    return %c0_i32, %c0_i32_0 : i32, i32
  }
  func.func @transform_2(%arg0: i32) -> (i32, i32) {
    %c0_i32 = arith.constant 0 : i32
    %c0_i32_0 = arith.constant 0 : i32
    %c0_i32_1 = arith.constant 0 : i32
    return %c0_i32, %c0_i32_0 : i32, i32
  }
  func.func @transform_3(%arg0: i32) -> (i32, i32) {
    %c0_i32 = arith.constant 0 : i32
    %c0_i32_0 = arith.constant 0 : i32
    %c0_i32_1 = arith.constant 0 : i32
    return %c0_i32, %c0_i32_0 : i32, i32
  }
  func.func @transform_4(%arg0: i32) -> (i32, i32) {
    %c0_i32 = arith.constant 0 : i32
    %c0_i32_0 = arith.constant 0 : i32
    return %arg0, %c0_i32 : i32, i32
  }
}

</mosaic_0001>

<llo_original>
// kernel: tpu_custom_call.1
$region0: #{tpu_custom_call.1}
  #allocation0 [shape = 'u32[]', space=smem, size = 0x4, offset = 0x4, fixed_abs, tag = 'smem constant byte address 0x4 - core index']
  #allocation1 [shape = 'u32[144,128]{1,0:T(1,128)}', space=vmem, size = 0x12000, scoped, tag = 'internal scratch']
  %s0 = inlined_call_operand.hbm [shape: f32[256,256], index: 0, kind: input, shape index: {}]
  %s1 = inlined_call_operand.hbm [shape: f32[256,128], index: 1, kind: input, shape index: {}]
  %s2 = inlined_call_operand.hbm [shape: f32[128,128], index: 2, kind: input, shape index: {}]
  %s3 = inlined_call_operand.vmem [shape: f32[1,128], index: 3, kind: input, shape index: {}]
  %s4 = inlined_call_operand.hbm [shape: f32[256,128], index: 4, kind: output, shape index: {}]
  %s5 = sld [smem:[#allocation0]]
  $region61: #{tpu_custom_call.1} parent=0
    _
  %s7 = ssub.s32 1, %s5
  %s8 = scalar_select 0, %s7, %s5
  $region1: #{tpu_custom_call.1} parent=0
    #allocation2 [shape = 'u8[262144]{0}', space=vmem, size = 0x40000, scoped, tag = 'input window, operand 0']
    #allocation3 [shape = 's32[2]{0}', space=sflag, size = 0x8, scoped, tag = 'scoped memory for tpu_custom_call.1']
    #allocation4 [shape = 's32[2]{0}', space=sflag, size = 0x8, scoped, tag = 'scoped memory for tpu_custom_call.1']
    #allocation5 [shape = 'u8[131072]{0}', space=vmem, size = 0x20000, scoped, tag = 'input window, operand 1, single buffered']
    #allocation6 [shape = 's32[1]{0}', space=sflag, size = 0x4, scoped, tag = 'scoped memory for tpu_custom_call.1']
    #allocation7 [shape = 'u8[65536]{0}', space=vmem, size = 0x10000, scoped, tag = 'input window, operand 2, single buffered']
    #allocation8 [shape = 'u8[131072]{0}', space=vmem, size = 0x20000, scoped, tag = 'output window, operand 0']
    %9 = vsyncpa [#allocation3], 0
    %s10 = scalar_lea.sflag [#allocation3], 1
    %11 = vsyncpa %s10, 0
    %12 = vsyncpa [#allocation6], 0
    %13 = vsyncpa [#allocation4], 0
    %s14 = scalar_lea.sflag [#allocation4], 1
    %15 = vsyncpa %s14, 0
    loop: start=0, step=1, limit=4
    $region2: #{tpu_custom_call.1} parent=1 // loop_pre_header
      _
    $region3: #{tpu_custom_call.1} parent=1 // loop_header
      %s17 = sphi 0, %s21
      %p18 = scmp.ge.s32.totalorder %s17, 4
      %s27 = sphi 0, %s29
      %s30 = sphi 0, %s27
      %s31 = sphi 0, %s30
      %s47 = sphi 0, %s31
      %s51 = sphi 0, %s51
      %s53 = sphi 0, %s51
      %s54 = sphi 0, %s53
      %s68 = sphi 0, %s54
      %s72 = sphi 0, %s72
      %s74 = sphi 0, %s72
      %s75 = sphi 0, %s74
      %s89 = sphi 0, %s75
      %s93 = sphi 0, %s93
      %s95 = sphi 0, %s93
      %s96 = sphi 0, %s95
      %s110 = sphi 0, %s96
      %s116 = sphi 0, %s118
      %s119 = sphi 0, %s116
      %s120 = sphi 0, %s119
      %s136 = sphi 0, %s120
    $region4: #{tpu_custom_call.1} parent=1 // loop_header_branch
      %20 = sbr.rel (%p18) target = $region8
    $region5: #{tpu_custom_call.1} parent=1 // loop_body
      %s22 = ssub.s32 %s17, 1
      %s23 = ssub.s32 %s17, 2
      %s24 = sadd.s32 %s17, 1
      %s25 = ssub.s32 %s17, %s24
      %p26 = scmp.eq.s32.totalorder %s25, 0
      %s28 = sadd.s32 %s27, 1
      %s29 = scalar_select %p26, %s27, %s28
      %p32 = pneg %p26
      %p33 = scmp.eq.s32.totalorder %s17, 1
      %p34 = por %p32, %p33
      %p35 = scmp.ne.s32.totalorder %s27, %s30
      %p36 = scmp.eq.s32.totalorder %s17, 0
      %p37 = por %p35, %p36
      %p38 = scmp.ne.s32.totalorder %s27, %s30
      %p39 = scmp.eq.s32.totalorder %s22, 1
      %p40 = por %p38, %p39
      %p41 = scmp.ne.s32.totalorder %s30, %s31
      %p42 = scmp.eq.s32.totalorder %s22, 0
      %p43 = por %p41, %p42
      %p44 = scmp.ne.s32.totalorder %s30, %s31
      %p45 = scmp.eq.s32.totalorder %s23, 1
      %p46 = por %p44, %p45
      %p48 = scmp.ne.s32.totalorder %s31, %s47
      %p49 = scmp.eq.s32.totalorder %s23, 0
      %p50 = por %p48, %p49
      %s52 = sadd.s32 %s51, 1
      %p55 = scmp.eq.s32.totalorder %s17, 1
      %p56 = scmp.ne.s32.totalorder %s51, %s53
      %p57 = scmp.eq.s32.totalorder %s17, 0
      %p58 = por %p56, %p57
      %p59 = scmp.ne.s32.totalorder %s51, %s53
      %p60 = scmp.eq.s32.totalorder %s22, 1
      %p61 = por %p59, %p60
      %p62 = scmp.ne.s32.totalorder %s53, %s54
      %p63 = scmp.eq.s32.totalorder %s22, 0
      %p64 = por %p62, %p63
      %p65 = scmp.ne.s32.totalorder %s53, %s54
      %p66 = scmp.eq.s32.totalorder %s23, 1
      %p67 = por %p65, %p66
      %p69 = scmp.ne.s32.totalorder %s54, %s68
      %p70 = scmp.eq.s32.totalorder %s23, 0
      %p71 = por %p69, %p70
      %s73 = sadd.s32 %s72, 1
      %p76 = scmp.eq.s32.totalorder %s17, 1
      %p77 = scmp.ne.s32.totalorder %s72, %s74
      %p78 = scmp.eq.s32.totalorder %s17, 0
      %p79 = por %p77, %p78
      %p80 = scmp.ne.s32.totalorder %s72, %s74
      %p81 = scmp.eq.s32.totalorder %s22, 1
      %p82 = por %p80, %p81
      %p83 = scmp.ne.s32.totalorder %s74, %s75
      %p84 = scmp.eq.s32.totalorder %s22, 0
      %p85 = por %p83, %p84
      %p86 = scmp.ne.s32.totalorder %s74, %s75
      %p87 = scmp.eq.s32.totalorder %s23, 1
      %p88 = por %p86, %p87
      %p90 = scmp.ne.s32.totalorder %s75, %s89
      %p91 = scmp.eq.s32.totalorder %s23, 0
      %p92 = por %p90, %p91
      %s94 = sadd.s32 %s93, 1
      %p97 = scmp.eq.s32.totalorder %s17, 1
      %p98 = scmp.ne.s32.totalorder %s93, %s95
      %p99 = scmp.eq.s32.totalorder %s17, 0
      %p100 = por %p98, %p99
      %p101 = scmp.ne.s32.totalorder %s93, %s95
      %p102 = scmp.eq.s32.totalorder %s22, 1
      %p103 = por %p101, %p102
      %p104 = scmp.ne.s32.totalorder %s95, %s96
      %p105 = scmp.eq.s32.totalorder %s22, 0
      %p106 = por %p104, %p105
      %p107 = scmp.ne.s32.totalorder %s95, %s96
      %p108 = scmp.eq.s32.totalorder %s23, 1
      %p109 = por %p107, %p108
      %p111 = scmp.ne.s32.totalorder %s96, %s110
      %p112 = scmp.eq.s32.totalorder %s23, 0
      %p113 = por %p111, %p112
      %s114 = ssub.s32 %s17, %s24
      %p115 = scmp.eq.s32.totalorder %s114, 0
      %s117 = sadd.s32 %s116, 1
      %s118 = scalar_select %p115, %s116, %s117
      %p121 = pneg %p115
      %p122 = scmp.eq.s32.totalorder %s17, 1
      %p123 = por %p121, %p122
      %p124 = scmp.ne.s32.totalorder %s116, %s119
      %p125 = scmp.eq.s32.totalorder %s17, 0
      %p126 = por %p124, %p125
      %p127 = scmp.ne.s32.totalorder %s116, %s119
      %p128 = scmp.eq.s32.totalorder %s22, 1
      %p129 = por %p127, %p128
      %p130 = scmp.ne.s32.totalorder %s119, %s120
      %p131 = scmp.eq.s32.totalorder %s22, 0
      %p132 = por %p130, %p131
      %p133 = scmp.ne.s32.totalorder %s119, %s120
      %p134 = scmp.eq.s32.totalorder %s23, 1
      %p135 = por %p133, %p134
      %p137 = scmp.ne.s32.totalorder %s120, %s136
      %p138 = scmp.eq.s32.totalorder %s23, 0
      %p139 = por %p137, %p138
      %p140 = scmp.le.s32.totalorder 1, %s17
      %p141 = scmp.lt.s32.totalorder %s17, 3
      %p142 = pnand %p140, %p141
      %p143 = pneg %p142
      // Predicated region
      $region9: #{tpu_custom_call.1} parent=5 // pred_check
        _
      $region10: #{tpu_custom_call.1} parent=5 // pred_check_branch
        %145 = sbr.rel (%p142) target = $region12
      $region11: #{tpu_custom_call.1} parent=5 // pred_region
        %s146 = ssub.s32 %s17, 1
        // Predicated region
        $region13: #{tpu_custom_call.1} parent=11 // pred_check
          %p147 = pneg %p64
        $region14: #{tpu_custom_call.1} parent=11 // pred_check_branch
          %149 = sbr.rel (%p147) target = $region16
        $region15: #{tpu_custom_call.1} parent=11 // pred_region
          %s151 = ssub.s32 4096, 4096
          %152 = vsyncadd [#allocation6], %s151
          %s153 = sshll.u32 [#allocation5], 4
          %s154 = int_to_ptr.vmem [resolvable:$true] %s153
          %159 = dma.hbm_to_vmem [thread:$0]  %s1, 4096, %s154, [#allocation6], 128, 128, 8
        $region16: #{tpu_custom_call.1} parent=11 // pred_fallthru
          _
        // Predicated region
        $region17: #{tpu_custom_call.1} parent=11 // pred_check
          %p160 = pneg %p85
        $region18: #{tpu_custom_call.1} parent=11 // pred_check_branch
          %162 = sbr.rel (%p160) target = $region20
        $region19: #{tpu_custom_call.1} parent=11 // pred_region
          %s164 = ssub.s32 2048, 2048
          %165 = vsyncadd [#allocation6], %s164
          %s166 = sshll.u32 [#allocation7], 4
          %s167 = int_to_ptr.vmem [resolvable:$true] %s166
          %172 = dma.hbm_to_vmem [thread:$0]  %s2, 2048, %s167, [#allocation6], 128, 128, 8
        $region20: #{tpu_custom_call.1} parent=11 // pred_fallthru
          _
        // Predicated region
        $region21: #{tpu_custom_call.1} parent=11 // pred_check
          %p173 = pneg %p106
        $region22: #{tpu_custom_call.1} parent=11 // pred_check_branch
          %175 = sbr.rel (%p173) target = $region24
        $region23: #{tpu_custom_call.1} parent=11 // pred_region
          _
        $region24: #{tpu_custom_call.1} parent=11 // pred_fallthru
          _
      $region12: #{tpu_custom_call.1} parent=5 // pred_fallthru
        _
      %p176 = scmp.lt.s32.totalorder %s17, 2
      // Predicated region
      $region25: #{tpu_custom_call.1} parent=5 // pred_check
        %p177 = pneg %p176
      $region26: #{tpu_custom_call.1} parent=5 // pred_check_branch
        %179 = sbr.rel (%p177) target = $region28
      $region27: #{tpu_custom_call.1} parent=5 // pred_region
        // Predicated region
        $region29: #{tpu_custom_call.1} parent=27 // pred_check
          %p180 = pneg %p37
        $region30: #{tpu_custom_call.1} parent=27 // pred_check_branch
          %182 = sbr.rel (%p180) target = $region32
        $region31: #{tpu_custom_call.1} parent=27 // pred_region
          %s183 = sand.u32 %s27, 1
          %s184 = scalar_lea.sflag [#allocation3], %s183
          %s185 = sand.u32 %s27, 1
          %s186 = smul.addr %s185, 256
          %s187 = scalar_lea.vmem [#allocation2], %s186
          %s188 = smul.u32 16, %s17
          %s190 = ssub.s32 4096, 4096
          %191 = vsyncadd %s184, %s190
          %s192 = smul.addr %s188, 2
          %s193 = smul.addr %s192, 128
          %s194 = scalar_lea.hbm %s0, %s193
          %s195 = sshll.u32 %s187, 4
          %s196 = int_to_ptr.vmem [resolvable:$true] %s195
          %201 = dma.hbm_to_vmem [thread:$0]  %s194, 4096, %s196, %s184, 256, 256, 16
        $region32: #{tpu_custom_call.1} parent=27 // pred_fallthru
          _
      $region28: #{tpu_custom_call.1} parent=5 // pred_fallthru
        _
      %p202 = scmp.le.s32.totalorder 1, %s17
      %p203 = scmp.lt.s32.totalorder %s17, 3
      %p204 = pnand %p202, %p203
      %p205 = pneg %p204
      // Predicated region
      $region33: #{tpu_custom_call.1} parent=5 // pred_check
        _
      $region34: #{tpu_custom_call.1} parent=5 // pred_check_branch
        %207 = sbr.rel (%p204) target = $region36
      $region35: #{tpu_custom_call.1} parent=5 // pred_region
        %s208 = ssub.s32 %s17, 1
        %s209 = sand.u32 %s30, 1
        %s210 = scalar_lea.sflag [#allocation3], %s209
        %s211 = sand.u32 %s30, 1
        %s212 = smul.addr %s211, 256
        %s213 = scalar_lea.vmem [#allocation2], %s212
        // Predicated region
        $region37: #{tpu_custom_call.1} parent=35 // pred_check
          %p214 = pneg %p43
        $region38: #{tpu_custom_call.1} parent=35 // pred_check_branch
          %216 = sbr.rel (%p214) target = $region40
        $region39: #{tpu_custom_call.1} parent=35 // pred_region
          %217 = dma.done %s210, 4096
        $region40: #{tpu_custom_call.1} parent=35 // pred_fallthru
          _
        // Predicated region
        $region41: #{tpu_custom_call.1} parent=35 // pred_check
          %p218 = pneg %p64
        $region42: #{tpu_custom_call.1} parent=35 // pred_check_branch
          %220 = sbr.rel (%p218) target = $region44
        $region43: #{tpu_custom_call.1} parent=35 // pred_region
          %221 = dma.done [#allocation6], 4096
        $region44: #{tpu_custom_call.1} parent=35 // pred_fallthru
          _
        // Predicated region
        $region45: #{tpu_custom_call.1} parent=35 // pred_check
          %p222 = pneg %p85
        $region46: #{tpu_custom_call.1} parent=35 // pred_check_branch
          %224 = sbr.rel (%p222) target = $region48
        $region47: #{tpu_custom_call.1} parent=35 // pred_region
          %225 = dma.done [#allocation6], 2048
        $region48: #{tpu_custom_call.1} parent=35 // pred_fallthru
          _
        %s226 = sand.u32 %s30, 1
        %s227 = scalar_lea.sflag [#allocation3], %s226
        %s228 = sand.u32 %s30, 1
        %s229 = smul.addr %s228, 256
        %s230 = scalar_lea.vmem [#allocation2], %s229
        %p231 = pneg %p43
        %p232 = pneg %p40
        %p233 = pneg %p64
        %p234 = pneg %p61
        %p235 = pneg %p85
        %p236 = pneg %p82
        %p237 = pneg %p106
        %p238 = pneg %p103
        %p239 = pneg %p132
        %p240 = pneg %p129
        %s241 = sand.u32 %s119, 1
        %s242 = scalar_lea.sflag [#allocation4], %s241
        %s243 = sand.u32 %s119, 1
        %s244 = smul.addr %s243, 128
        %s245 = scalar_lea.vmem [#allocation8], %s244
        %s246 = smul.u32 16, %s22
        %s247 = smul.u32 16, %s22
        %v248 = vld [vmem:[%s213] sm:$0xff]
        %v249 = vld [vmem:[%s213 + $0x8] sm:$0xff]
        %v250 = vld [vmem:[%s213 + $0x10] sm:$0xff]
        %v251 = vld [vmem:[%s213 + $0x18] sm:$0xff]
        %v252 = vld [vmem:[%s213 + $0x20] sm:$0xff]
        %v253 = vld [vmem:[%s213 + $0x28] sm:$0xff]
        %v254 = vld [vmem:[%s213 + $0x30] sm:$0xff]
        %v255 = vld [vmem:[%s213 + $0x38] sm:$0xff]
        %v256 = vld [vmem:[%s213 + $0x40] sm:$0xff]
        %v257 = vld [vmem:[%s213 + $0x48] sm:$0xff]
        %v258 = vld [vmem:[%s213 + $0x50] sm:$0xff]
        %v259 = vld [vmem:[%s213 + $0x58] sm:$0xff]
        %v260 = vld [vmem:[%s213 + $0x60] sm:$0xff]
        %v261 = vld [vmem:[%s213 + $0x68] sm:$0xff]
        %v262 = vld [vmem:[%s213 + $0x70] sm:$0xff]
        %v263 = vld [vmem:[%s213 + $0x78] sm:$0xff]
        %v264 = vld [vmem:[%s213 + $0x80] sm:$0xff]
        %v265 = vld [vmem:[%s213 + $0x88] sm:$0xff]
        %v266 = vld [vmem:[%s213 + $0x90] sm:$0xff]
        %v267 = vld [vmem:[%s213 + $0x98] sm:$0xff]
        %v268 = vld [vmem:[%s213 + $0xa0] sm:$0xff]
        %v269 = vld [vmem:[%s213 + $0xa8] sm:$0xff]
        %v270 = vld [vmem:[%s213 + $0xb0] sm:$0xff]
        %v271 = vld [vmem:[%s213 + $0xb8] sm:$0xff]
        %v272 = vld [vmem:[%s213 + $0xc0] sm:$0xff]
        %v273 = vld [vmem:[%s213 + $0xc8] sm:$0xff]
        %v274 = vld [vmem:[%s213 + $0xd0] sm:$0xff]
        %v275 = vld [vmem:[%s213 + $0xd8] sm:$0xff]
        %v276 = vld [vmem:[%s213 + $0xe0] sm:$0xff]
        %v277 = vld [vmem:[%s213 + $0xe8] sm:$0xff]
        %v278 = vld [vmem:[%s213 + $0xf0] sm:$0xff]
        %v279 = vld [vmem:[%s213 + $0xf8] sm:$0xff]
        %v280 = vld [vmem:[#allocation5] sm:$0xff]
        %v281 = vld [vmem:[#allocation5 + $0x8] sm:$0xff]
        %v282 = vld [vmem:[#allocation5 + $0x10] sm:$0xff]
        %v283 = vld [vmem:[#allocation5 + $0x18] sm:$0xff]
        %v284 = vld [vmem:[#allocation5 + $0x20] sm:$0xff]
        %v285 = vld [vmem:[#allocation5 + $0x28] sm:$0xff]
        %v286 = vld [vmem:[#allocation5 + $0x30] sm:$0xff]
        %v287 = vld [vmem:[#allocation5 + $0x38] sm:$0xff]
        %v288 = vld [vmem:[#allocation5 + $0x40] sm:$0xff]
        %v289 = vld [vmem:[#allocation5 + $0x48] sm:$0xff]
        %v290 = vld [vmem:[#allocation5 + $0x50] sm:$0xff]
        %v291 = vld [vmem:[#allocation5 + $0x58] sm:$0xff]
        %v292 = vld [vmem:[#allocation5 + $0x60] sm:$0xff]
        %v293 = vld [vmem:[#allocation5 + $0x68] sm:$0xff]
        %v294 = vld [vmem:[#allocation5 + $0x70] sm:$0xff]
        %v295 = vld [vmem:[#allocation5 + $0x78] sm:$0xff]
        %v296 = vld [vmem:[#allocation5 + $0x80] sm:$0xff]
        %v297 = vld [vmem:[#allocation5 + $0x88] sm:$0xff]
        %v298 = vld [vmem:[#allocation5 + $0x90] sm:$0xff]
        %v299 = vld [vmem:[#allocation5 + $0x98] sm:$0xff]
        %v300 = vld [vmem:[#allocation5 + $0xa0] sm:$0xff]
        %v301 = vld [vmem:[#allocation5 + $0xa8] sm:$0xff]
        %v302 = vld [vmem:[#allocation5 + $0xb0] sm:$0xff]
        %v303 = vld [vmem:[#allocation5 + $0xb8] sm:$0xff]
        %v304 = vld [vmem:[#allocation5 + $0xc0] sm:$0xff]
        %v305 = vld [vmem:[#allocation5 + $0xc8] sm:$0xff]
        %v306 = vld [vmem:[#allocation5 + $0xd0] sm:$0xff]
        %v307 = vld [vmem:[#allocation5 + $0xd8] sm:$0xff]
        %v308 = vld [vmem:[#allocation5 + $0xe0] sm:$0xff]
        %v309 = vld [vmem:[#allocation5 + $0xe8] sm:$0xff]
        %v310 = vld [vmem:[#allocation5 + $0xf0] sm:$0xff]
        %v311 = vld [vmem:[#allocation5 + $0xf8] sm:$0xff]
        %312 = vmatprep.subr.mxu0 0.0
        %313 = vmatpush1.msra.mxu0 %v280
        %314 = vmatprep.subr.mxu0 0.0
        %315 = vmatpush1.msra.mxu0 %v281
        %316 = vmatprep.subr.mxu0 0.0
        %317 = vmatpush1.msra.mxu0 %v282
        %318 = vmatprep.subr.mxu0 0.0
        %319 = vmatpush1.msra.mxu0 %v283
        %320 = vmatprep.subr.mxu0 0.0
        %321 = vmatpush1.msra.mxu0 %v284
        %322 = vmatprep.subr.mxu0 0.0
        %323 = vmatpush1.msra.mxu0 %v285
        %324 = vmatprep.subr.mxu0 0.0
        %325 = vmatpush1.msra.mxu0 %v286
        %326 = vmatprep.subr.mxu0 0.0
        %327 = vmatpush1.msra.mxu0 %v287
        %328 = vmatprep.subr.mxu0 0.0
        %329 = vmatpush1.msra.mxu0 %v288
        %330 = vmatprep.subr.mxu0 0.0
        %331 = vmatpush1.msra.mxu0 %v289
        %332 = vmatprep.subr.mxu0 0.0
        %333 = vmatpush1.msra.mxu0 %v290
        %334 = vmatprep.subr.mxu0 0.0
        %335 = vmatpush1.msra.mxu0 %v291
        %336 = vmatprep.subr.mxu0 0.0
        %337 = vmatpush1.msra.mxu0 %v292
        %338 = vmatprep.subr.mxu0 0.0
        %339 = vmatpush1.msra.mxu0 %v293
        %340 = vmatprep.subr.mxu0 0.0
        %341 = vmatpush1.msra.mxu0 %v294
        %342 = vmatprep.subr.mxu0 0.0
        %343 = vmatpush1.msra.mxu0 %v295
        %344 = vmatprep.subr.mxu0 0.0
        %345 = vmatpush1.msra.mxu0 %v296
        %346 = vmatprep.subr.mxu0 0.0
        %347 = vmatpush1.msra.mxu0 %v297
        %348 = vmatprep.subr.mxu0 0.0
        %349 = vmatpush1.msra.mxu0 %v298
        %350 = vmatprep.subr.mxu0 0.0
        %351 = vmatpush1.msra.mxu0 %v299
        %352 = vmatprep.subr.mxu0 0.0
        %353 = vmatpush1.msra.mxu0 %v300
        %354 = vmatprep.subr.mxu0 0.0
        %355 = vmatpush1.msra.mxu0 %v301
        %356 = vmatprep.subr.mxu0 0.0
        %357 = vmatpush1.msra.mxu0 %v302
        %358 = vmatprep.subr.mxu0 0.0
        %359 = vmatpush1.msra.mxu0 %v303
        %360 = vmatprep.subr.mxu0 0.0
        %361 = vmatpush1.msra.mxu0 %v304
        %362 = vmatprep.subr.mxu0 0.0
        %363 = vmatpush1.msra.mxu0 %v305
        %364 = vmatprep.subr.mxu0 0.0
        %365 = vmatpush1.msra.mxu0 %v306
        %366 = vmatprep.subr.mxu0 0.0
        %367 = vmatpush1.msra.mxu0 %v307
        %368 = vmatprep.subr.mxu0 0.0
        %369 = vmatpush1.msra.mxu0 %v308
        %370 = vmatprep.subr.mxu0 0.0
        %371 = vmatpush1.msra.mxu0 %v309
        %372 = vmatprep.subr.mxu0 0.0
        %373 = vmatpush1.msra.mxu0 %v310
        %374 = vmatprep.subr.mxu0 0.0
        %375 = vmatpush1.msra.mxu0 %v311
        %376 = vmatprep.mubr.f32.mxu0 %v249
        %377 = vmatmul.mubr.f32.gmra.mrb[0].mxu0 %v248
        %v378 = vpop.f32.mrb[0].mxu0
        %v379 = vadd.f32 0.0, %v378
        %v380 = vpop.f32.mrb[0].mxu0
        %381 = vmatprep.mubr.f32.mxu0 %v251
        %382 = vmatmul.mubr.f32.gmra.mrb[0].mxu0 %v250
        %v383 = vpop.f32.mrb[0].mxu0
        %v384 = vadd.f32 0.0, %v383
        %v385 = vpop.f32.mrb[0].mxu0
        %386 = vmatprep.mubr.f32.mxu0 %v253
        %387 = vmatmul.mubr.f32.gmra.mrb[0].mxu0 %v252
        %v388 = vpop.f32.mrb[0].mxu0
        %v389 = vadd.f32 0.0, %v388
        %v390 = vpop.f32.mrb[0].mxu0
        %391 = vmatprep.mubr.f32.mxu0 %v255
        %392 = vmatmul.mubr.f32.gmra.mrb[0].mxu0 %v254
        %v393 = vpop.f32.mrb[0].mxu0
        %v394 = vadd.f32 0.0, %v393
        %v395 = vpop.f32.mrb[0].mxu0
        %396 = vmatprep.mubr.f32.mxu0 %v257
        %397 = vmatmul.mubr.f32.gmra.mrb[0].mxu0 %v256
        %v398 = vpop.f32.mrb[0].mxu0
        %v399 = vadd.f32 0.0, %v398
        %v400 = vpop.f32.mrb[0].mxu0
        %401 = vmatprep.mubr.f32.mxu0 %v259
        %402 = vmatmul.mubr.f32.gmra.mrb[0].mxu0 %v258
        %v403 = vpop.f32.mrb[0].mxu0
        %v404 = vadd.f32 0.0, %v403
        %v405 = vpop.f32.mrb[0].mxu0
        %406 = vmatprep.mubr.f32.mxu0 %v261
        %407 = vmatmul.mubr.f32.gmra.mrb[0].mxu0 %v260
        %v408 = vpop.f32.mrb[0].mxu0
        %v409 = vadd.f32 0.0, %v408
        %v410 = vpop.f32.mrb[0].mxu0
        %411 = vmatprep.mubr.f32.mxu0 %v263
        %412 = vmatmul.mubr.f32.gmra.mrb[0].mxu0 %v262
        %v413 = vpop.f32.mrb[0].mxu0
        %v414 = vadd.f32 0.0, %v413
        %v415 = vpop.f32.mrb[0].mxu0
        %416 = vmatprep.mubr.f32.mxu0 %v265
        %417 = vmatmul.mubr.f32.gmra.mrb[0].mxu0 %v264
        %v418 = vpop.f32.mrb[0].mxu0
        %v419 = vadd.f32 0.0, %v418
        %v420 = vpop.f32.mrb[0].mxu0
        %421 = vmatprep.mubr.f32.mxu0 %v267
        %422 = vmatmul.mubr.f32.gmra.mrb[0].mxu0 %v266
        %v423 = vpop.f32.mrb[0].mxu0
        %v424 = vadd.f32 0.0, %v423
        %v425 = vpop.f32.mrb[0].mxu0
        %426 = vmatprep.mubr.f32.mxu0 %v269
        %427 = vmatmul.mubr.f32.gmra.mrb[0].mxu0 %v268
        %v428 = vpop.f32.mrb[0].mxu0
        %v429 = vadd.f32 0.0, %v428
        %v430 = vpop.f32.mrb[0].mxu0
        %431 = vmatprep.mubr.f32.mxu0 %v271
        %432 = vmatmul.mubr.f32.gmra.mrb[0].mxu0 %v270
        %v433 = vpop.f32.mrb[0].mxu0
        %v434 = vadd.f32 0.0, %v433
        %v435 = vpop.f32.mrb[0].mxu0
        %436 = vmatprep.mubr.f32.mxu0 %v273
        %437 = vmatmul.mubr.f32.gmra.mrb[0].mxu0 %v272
        %v438 = vpop.f32.mrb[0].mxu0
        %v439 = vadd.f32 0.0, %v438
        %v440 = vpop.f32.mrb[0].mxu0
        %441 = vmatprep.mubr.f32.mxu0 %v275
        %442 = vmatmul.mubr.f32.gmra.mrb[0].mxu0 %v274
        %v443 = vpop.f32.mrb[0].mxu0
        %v444 = vadd.f32 0.0, %v443
        %v445 = vpop.f32.mrb[0].mxu0
        %446 = vmatprep.mubr.f32.mxu0 %v277
        %447 = vmatmul.mubr.f32.gmra.mrb[0].mxu0 %v276
        %v448 = vpop.f32.mrb[0].mxu0
        %v449 = vadd.f32 0.0, %v448
        %v450 = vpop.f32.mrb[0].mxu0
        %451 = vmatprep.mubr.f32.mxu0 %v279
        %452 = vmatmul.mubr.f32.gmra.mrb[0].mxu0 %v278
        %v453 = vpop.f32.mrb[0].mxu0
        %v454 = vadd.f32 0.0, %v453
        %v455 = vpop.f32.mrb[0].mxu0
        %456 = vdwg.mxu0
        %v457 = vld [vmem:[#allocation7] sm:$0xff]
        %v458 = vld [vmem:[#allocation7 + $0x8] sm:$0xff]
        %v459 = vld [vmem:[#allocation7 + $0x10] sm:$0xff]
        %v460 = vld [vmem:[#allocation7 + $0x18] sm:$0xff]
        %v461 = vld [vmem:[#allocation7 + $0x20] sm:$0xff]
        %v462 = vld [vmem:[#allocation7 + $0x28] sm:$0xff]
        %v463 = vld [vmem:[#allocation7 + $0x30] sm:$0xff]
        %v464 = vld [vmem:[#allocation7 + $0x38] sm:$0xff]
        %v465 = vld [vmem:[#allocation7 + $0x40] sm:$0xff]
        %v466 = vld [vmem:[#allocation7 + $0x48] sm:$0xff]
        %v467 = vld [vmem:[#allocation7 + $0x50] sm:$0xff]
        %v468 = vld [vmem:[#allocation7 + $0x58] sm:$0xff]
        %v469 = vld [vmem:[#allocation7 + $0x60] sm:$0xff]
        %v470 = vld [vmem:[#allocation7 + $0x68] sm:$0xff]
        %v471 = vld [vmem:[#allocation7 + $0x70] sm:$0xff]
        %v472 = vld [vmem:[#allocation7 + $0x78] sm:$0xff]
        %v473 = vld [vmem:[%s3] sm:$0x1]
        %v475 = vlaneseq
        %v476 = vshrl.u32 %v475, 7
        %v477 = vsub.s32 0, %v476
        %v478 = vrot.slane %v473, %v477
        %480 = vmatprep.subr.mxu0 0.0
        %481 = vmatpush1.msra.mxu0 %v457
        %482 = vmatprep.subr.mxu0 0.0
        %483 = vmatpush1.msra.mxu0 %v458
        %484 = vmatprep.subr.mxu0 0.0
        %485 = vmatpush1.msra.mxu0 %v459
        %486 = vmatprep.subr.mxu0 0.0
        %487 = vmatpush1.msra.mxu0 %v460
        %488 = vmatprep.subr.mxu0 0.0
        %489 = vmatpush1.msra.mxu0 %v461
        %490 = vmatprep.subr.mxu0 0.0
        %491 = vmatpush1.msra.mxu0 %v462
        %492 = vmatprep.subr.mxu0 0.0
        %493 = vmatpush1.msra.mxu0 %v463
        %494 = vmatprep.subr.mxu0 0.0
        %495 = vmatpush1.msra.mxu0 %v464
        %496 = vmatprep.subr.mxu0 0.0
        %497 = vmatpush1.msra.mxu0 %v465
        %498 = vmatprep.subr.mxu0 0.0
        %499 = vmatpush1.msra.mxu0 %v466
        %500 = vmatprep.subr.mxu0 0.0
        %501 = vmatpush1.msra.mxu0 %v467
        %502 = vmatprep.subr.mxu0 0.0
        %503 = vmatpush1.msra.mxu0 %v468
        %504 = vmatprep.subr.mxu0 0.0
        %505 = vmatpush1.msra.mxu0 %v469
        %506 = vmatprep.subr.mxu0 0.0
        %507 = vmatpush1.msra.mxu0 %v470
        %508 = vmatprep.subr.mxu0 0.0
        %509 = vmatpush1.msra.mxu0 %v471
        %510 = vmatprep.subr.mxu0 0.0
        %511 = vmatpush1.msra.mxu0 %v472
        %512 = vmatprep.subr.mxu0 0.0
        %513 = vmatpush1.msra.mxu0 0.0
        %514 = vmatprep.subr.mxu0 0.0
        %515 = vmatpush1.msra.mxu0 0.0
        %516 = vmatprep.subr.mxu0 0.0
        %517 = vmatpush1.msra.mxu0 0.0
        %518 = vmatprep.subr.mxu0 0.0
        %519 = vmatpush1.msra.mxu0 0.0
        %520 = vmatprep.subr.mxu0 0.0
        %521 = vmatpush1.msra.mxu0 0.0
        %522 = vmatprep.subr.mxu0 0.0
        %523 = vmatpush1.msra.mxu0 0.0
        %524 = vmatprep.subr.mxu0 0.0
        %525 = vmatpush1.msra.mxu0 0.0
        %526 = vmatprep.subr.mxu0 0.0
        %527 = vmatpush1.msra.mxu0 0.0
        %528 = vmatprep.subr.mxu0 0.0
        %529 = vmatpush1.msra.mxu0 0.0
        %530 = vmatprep.subr.mxu0 0.0
        %531 = vmatpush1.msra.mxu0 0.0
        %532 = vmatprep.subr.mxu0 0.0
        %533 = vmatpush1.msra.mxu0 0.0
        %534 = vmatprep.subr.mxu0 0.0
        %535 = vmatpush1.msra.mxu0 0.0
        %536 = vmatprep.subr.mxu0 0.0
        %537 = vmatpush1.msra.mxu0 0.0
        %538 = vmatprep.subr.mxu0 0.0
        %539 = vmatpush1.msra.mxu0 0.0
        %540 = vmatprep.subr.mxu0 0.0
        %541 = vmatpush1.msra.mxu0 0.0
        %542 = vmatprep.subr.mxu0 0.0
        %543 = vmatpush1.msra.mxu0 0.0
        %544 = vmatprep.mubr.f32.mxu0 0.0
        %545 = vmatmul.mubr.f32.gmra.mrb[0].mxu0 %v379
        %v546 = vpop.f32.mrb[0].mxu0
        %v547 = vadd.f32 %v478, %v546
        %v548 = vpop.f32.mrb[0].mxu0
        %549 = vmatprep.mubr.f32.mxu0 0.0
        %550 = vmatmul.mubr.f32.gmra.mrb[0].mxu0 %v384
        %v551 = vpop.f32.mrb[0].mxu0
        %v552 = vadd.f32 %v478, %v551
        %v553 = vpop.f32.mrb[0].mxu0
        %554 = vmatprep.mubr.f32.mxu0 0.0
        %555 = vmatmul.mubr.f32.gmra.mrb[0].mxu0 %v389
        %v556 = vpop.f32.mrb[0].mxu0
        %v557 = vadd.f32 %v478, %v556
        %v558 = vpop.f32.mrb[0].mxu0
        %559 = vmatprep.mubr.f32.mxu0 0.0
        %560 = vmatmul.mubr.f32.gmra.mrb[0].mxu0 %v394
        %v561 = vpop.f32.mrb[0].mxu0
        %v562 = vadd.f32 %v478, %v561
        %v563 = vpop.f32.mrb[0].mxu0
        %564 = vmatprep.mubr.f32.mxu0 0.0
        %565 = vmatmul.mubr.f32.gmra.mrb[0].mxu0 %v399
        %v566 = vpop.f32.mrb[0].mxu0
        %v567 = vadd.f32 %v478, %v566
        %v568 = vpop.f32.mrb[0].mxu0
        %569 = vmatprep.mubr.f32.mxu0 0.0
        %570 = vmatmul.mubr.f32.gmra.mrb[0].mxu0 %v404
        %v571 = vpop.f32.mrb[0].mxu0
        %v572 = vadd.f32 %v478, %v571
        %v573 = vpop.f32.mrb[0].mxu0
        %574 = vmatprep.mubr.f32.mxu0 0.0
        %575 = vmatmul.mubr.f32.gmra.mrb[0].mxu0 %v409
        %v576 = vpop.f32.mrb[0].mxu0
        %v577 = vadd.f32 %v478, %v576
        %v578 = vpop.f32.mrb[0].mxu0
        %579 = vmatprep.mubr.f32.mxu0 0.0
        %580 = vmatmul.mubr.f32.gmra.mrb[0].mxu0 %v414
        %v581 = vpop.f32.mrb[0].mxu0
        %v582 = vadd.f32 %v478, %v581
        %v583 = vpop.f32.mrb[0].mxu0
        %584 = vmatprep.mubr.f32.mxu0 0.0
        %585 = vmatmul.mubr.f32.gmra.mrb[0].mxu0 %v419
        %v586 = vpop.f32.mrb[0].mxu0
        %v587 = vadd.f32 %v478, %v586
        %v588 = vpop.f32.mrb[0].mxu0
        %589 = vmatprep.mubr.f32.mxu0 0.0
        %590 = vmatmul.mubr.f32.gmra.mrb[0].mxu0 %v424
        %v591 = vpop.f32.mrb[0].mxu0
        %v592 = vadd.f32 %v478, %v591
        %v593 = vpop.f32.mrb[0].mxu0
        %594 = vmatprep.mubr.f32.mxu0 0.0
        %595 = vmatmul.mubr.f32.gmra.mrb[0].mxu0 %v429
        %v596 = vpop.f32.mrb[0].mxu0
        %v597 = vadd.f32 %v478, %v596
        %v598 = vpop.f32.mrb[0].mxu0
        %599 = vmatprep.mubr.f32.mxu0 0.0
        %600 = vmatmul.mubr.f32.gmra.mrb[0].mxu0 %v434
        %v601 = vpop.f32.mrb[0].mxu0
        %v602 = vadd.f32 %v478, %v601
        %v603 = vpop.f32.mrb[0].mxu0
        %604 = vmatprep.mubr.f32.mxu0 0.0
        %605 = vmatmul.mubr.f32.gmra.mrb[0].mxu0 %v439
        %v606 = vpop.f32.mrb[0].mxu0
        %v607 = vadd.f32 %v478, %v606
        %v608 = vpop.f32.mrb[0].mxu0
        %609 = vmatprep.mubr.f32.mxu0 0.0
        %610 = vmatmul.mubr.f32.gmra.mrb[0].mxu0 %v444
        %v611 = vpop.f32.mrb[0].mxu0
        %v612 = vadd.f32 %v478, %v611
        %v613 = vpop.f32.mrb[0].mxu0
        %614 = vmatprep.mubr.f32.mxu0 0.0
        %615 = vmatmul.mubr.f32.gmra.mrb[0].mxu0 %v449
        %v616 = vpop.f32.mrb[0].mxu0
        %v617 = vadd.f32 %v478, %v616
        %v618 = vpop.f32.mrb[0].mxu0
        %619 = vmatprep.mubr.f32.mxu0 0.0
        %620 = vmatmul.mubr.f32.gmra.mrb[0].mxu0 %v454
        %v621 = vpop.f32.mrb[0].mxu0
        %v622 = vadd.f32 %v478, %v621
        %v623 = vpop.f32.mrb[0].mxu0
        %624 = vdwg.mxu0
        %625 = vst [vmem:[%s245] sm:$0xff] %v547
        %626 = vst [vmem:[%s245 + $0x8] sm:$0xff] %v552
        %627 = vst [vmem:[%s245 + $0x10] sm:$0xff] %v557
        %628 = vst [vmem:[%s245 + $0x18] sm:$0xff] %v562
        %629 = vst [vmem:[%s245 + $0x20] sm:$0xff] %v567
        %630 = vst [vmem:[%s245 + $0x28] sm:$0xff] %v572
        %631 = vst [vmem:[%s245 + $0x30] sm:$0xff] %v577
        %632 = vst [vmem:[%s245 + $0x38] sm:$0xff] %v582
        %633 = vst [vmem:[%s245 + $0x40] sm:$0xff] %v587
        %634 = vst [vmem:[%s245 + $0x48] sm:$0xff] %v592
        %635 = vst [vmem:[%s245 + $0x50] sm:$0xff] %v597
        %636 = vst [vmem:[%s245 + $0x58] sm:$0xff] %v602
        %637 = vst [vmem:[%s245 + $0x60] sm:$0xff] %v607
        %638 = vst [vmem:[%s245 + $0x68] sm:$0xff] %v612
        %639 = vst [vmem:[%s245 + $0x70] sm:$0xff] %v617
        %640 = vst [vmem:[%s245 + $0x78] sm:$0xff] %v622
        %s641 = sand.u32 %s119, 1
        %s642 = scalar_lea.sflag [#allocation4], %s641
        %s643 = sand.u32 %s119, 1
        %s644 = smul.addr %s643, 128
        %s645 = scalar_lea.vmem [#allocation8], %s644
        // Predicated region
        $region49: #{tpu_custom_call.1} parent=35 // pred_check
          %p646 = pneg %p129
        $region50: #{tpu_custom_call.1} parent=35 // pred_check_branch
          %648 = sbr.rel (%p646) target = $region52
        $region51: #{tpu_custom_call.1} parent=35 // pred_region
          %s649 = smul.u32 16, %s22
          %s651 = ssub.s32 2048, 2048
          %652 = vsyncadd %s642, %s651
          %s653 = smul.addr %s649, 128
          %s654 = scalar_lea.hbm %s4, %s653
          %s655 = sshll.u32 %s645, 4
          %s656 = int_to_ptr.vmem [resolvable:$true] %s655
          %661 = dma.vmem_to_hbm [thread:$0]  %s656, 2048, %s654, %s642, 128, 128, 8
        $region52: #{tpu_custom_call.1} parent=35 // pred_fallthru
          _
      $region36: #{tpu_custom_call.1} parent=5 // pred_fallthru
        _
      %p662 = scmp.le.s32.totalorder 2, %s17
      // Predicated region
      $region53: #{tpu_custom_call.1} parent=5 // pred_check
        %p663 = pneg %p662
      $region54: #{tpu_custom_call.1} parent=5 // pred_check_branch
        %665 = sbr.rel (%p663) target = $region56
      $region55: #{tpu_custom_call.1} parent=5 // pred_region
        %s666 = ssub.s32 %s17, 2
        // Predicated region
        $region57: #{tpu_custom_call.1} parent=55 // pred_check
          %p667 = pneg %p135
        $region58: #{tpu_custom_call.1} parent=55 // pred_check_branch
          %669 = sbr.rel (%p667) target = $region60
        $region59: #{tpu_custom_call.1} parent=55 // pred_region
          %s670 = sand.u32 %s120, 1
          %s671 = scalar_lea.sflag [#allocation4], %s670
          %s672 = sand.u32 %s120, 1
          %s673 = smul.addr %s672, 128
          %s674 = scalar_lea.vmem [#allocation8], %s673
          %675 = dma.done %s671, 2048
        $region60: #{tpu_custom_call.1} parent=55 // pred_fallthru
          _
      $region56: #{tpu_custom_call.1} parent=5 // pred_fallthru
        _
    $region6: #{tpu_custom_call.1} parent=1 // loop_footer
      %s21 = sadd.s32 1, %s17
    $region7: #{tpu_custom_call.1} parent=1 // loop_footer_branch
      %16 = sbr.rel target = $region3
    $region8: #{tpu_custom_call.1} parent=1 // loop_exit
      _
    %676 = vsyncpa [#allocation3], 1
    %s677 = scalar_lea.sflag [#allocation3], 1
    %678 = vsyncpa %s677, 1
    %679 = vsyncpa [#allocation6], 1
    %680 = vsyncpa [#allocation4], 1
    %s681 = scalar_lea.sflag [#allocation4], 1
    %682 = vsyncpa %s681, 1

</llo_original>
